<compile_context>
chip_gen: v7x
topology: tpu7x:2x2x1
jax: 0.10.0
libtpu: 0.0.40
codegen_flags: <defaults>
</compile_context>

<pallas_src>
import functools

import jax
import jax.numpy as jnp
from jax.experimental import pallas as pl
from jax.experimental.pallas import tpu as pltpu


def _regression_loss_kernel(pred_ref, targ_ref, mask_ref, out_ref, *, loss_name):
    pred = pred_ref[...].astype(jnp.float32)   # (TR, D)
    targ = targ_ref[...].astype(jnp.float32)   # (TR, D)
    diff = pred - targ

    if loss_name == "mse":
        elem = diff * diff                                      # MSELoss(reduction='none')
    elif loss_name == "huber":
        abs_d = jnp.abs(diff)                                   # SmoothL1Loss(reduction='none'), beta=1.0
        elem = jnp.where(abs_d < 1.0, 0.5 * diff * diff, abs_d - 0.5)
    else:
        raise ValueError(f"unknown loss_name: {loss_name}")

    mask = mask_ref[...]                                        # (TR, 1) f32, 1.0 where label == 1
    row = jnp.sum(elem, axis=-1, keepdims=True)                 # (TR, 1) per-row loss sum (reduce over D first)

    out_ref[0, 0] = jnp.sum(row * mask)                         # partial masked-loss numerator
    out_ref[0, 1] = jnp.sum(mask)                               # partial masked-row count


def _choose_row_tile(R, D, itemsize, target_block_bytes=2 << 20):
    """Largest row tile (multiple of the dtype's sublane quantum) ~target bytes."""
    sub = max(8, 32 // max(itemsize, 1))                # 8 for f32, 16 for bf16, 32 for int8
    target = target_block_bytes // max(D * itemsize, 1)
    target = max(sub, min(1024, (target // sub) * sub))
    r_ceil = -(-R // sub) * sub
    if r_ceil <= target:
        return r_ceil                                   # single block (maybe a few padded rows)
    for tr in range(target, sub - 1, -sub):
        if R % tr == 0:
            return tr                                   # exact divisor -> no HBM padding copy
    return target                                       # fall back: pad rows up to a multiple


def regression_loss(prediction_scores_a, audio_target, audio_labels, *, loss_name="mse"):
    B, T, D = prediction_scores_a.shape
    R = B * T
    itemsize = jnp.dtype(prediction_scores_a.dtype).itemsize

    TR = _choose_row_tile(R, D, itemsize)
    NB = -(-R // TR)
    R_pad = NB * TR

    pred2 = prediction_scores_a.reshape(R, D)
    targ2 = audio_target.reshape(R, D)
    mask = (audio_labels.reshape(R) == 1).astype(jnp.float32)

    if R_pad != R:
        pad = R_pad - R
        pred2 = jnp.pad(pred2, ((0, pad), (0, 0)))
        targ2 = jnp.pad(targ2, ((0, pad), (0, 0)))
        mask = jnp.pad(mask, (0, pad))                  # padded rows have mask 0 -> contribute nothing
    mask2 = mask.reshape(R_pad, 1)

    kernel = functools.partial(_regression_loss_kernel, loss_name=loss_name)

    partials = pl.pallas_call(
        kernel,
        out_shape=jax.ShapeDtypeStruct((NB, 2), jnp.float32),
        grid_spec=pltpu.PrefetchScalarGridSpec(
            num_scalar_prefetch=0,
            grid=(NB,),
            in_specs=[
                pl.BlockSpec((TR, D), lambda i: (i, 0)),
                pl.BlockSpec((TR, D), lambda i: (i, 0)),
                pl.BlockSpec((TR, 1), lambda i: (i, 0)),
            ],
            out_specs=pl.BlockSpec((1, 2), lambda i: (i, 0),
                                   memory_space=pltpu.SMEM),
        ),
        compiler_params=pltpu.CompilerParams(
            dimension_semantics=("parallel",),          # independent per-block partials
            vmem_limit_bytes=32 * 1024 * 1024,
        ),
    )(pred2, targ2, mask2)

    num = jnp.sum(partials[:, 0])
    cnt = jnp.sum(partials[:, 1])
    den = jnp.maximum(cnt * float(D), 1.0)              # max(sum(expanded mask), 1)
    return num / den


def _reference(pred, targ, labels, loss_name):
    pred = pred.astype(jnp.float32)
    targ = targ.astype(jnp.float32)
    diff = pred - targ
    if loss_name == "mse":
        elem = diff * diff
    else:
        a = jnp.abs(diff)
        elem = jnp.where(a < 1.0, 0.5 * diff * diff, a - 0.5)
    mask = (labels == 1).astype(jnp.float32)[:, :, None]
    num = jnp.sum(elem * mask)
    den = jnp.maximum(jnp.sum(mask) * pred.shape[-1], 1.0)
    return num / den


if __name__ == "__main__":
    key = jax.random.PRNGKey(0)
    ok = True

    cases = [
        # (B, T, D, dtype, label_mode)
        (2, 8, 32, jnp.float32, "random"),
        (3, 7, 48, jnp.float32, "random"),    # B*T=21 -> exercises row padding
        (2, 8, 32, jnp.bfloat16, "random"),   # native bf16 on the wire
        (2, 8, 32, jnp.float32, "zeros"),     # no masked rows -> max(den, 1) clamp
    ]
    for (B, T, D, dtype, label_mode) in cases:
        key, k1, k2, k3 = jax.random.split(key, 4)
        pred = jax.random.normal(k1, (B, T, D), dtype=jnp.float32).astype(dtype)
        targ = jax.random.normal(k2, (B, T, D), dtype=jnp.float32).astype(dtype)
        if label_mode == "zeros":
            labels = jnp.zeros((B, T), dtype=jnp.int32)
        else:
            labels = jax.random.randint(k3, (B, T), 0, 2, dtype=jnp.int32)

        for loss_name in ("mse", "huber"):
            out = jax.block_until_ready(
                regression_loss(pred, targ, labels, loss_name=loss_name))
            ref = _reference(pred, targ, labels, loss_name)
            if not jnp.allclose(out, ref, rtol=1e-5, atol=1e-5):
                ok = False
                print(f"MISMATCH ({loss_name}, {jnp.dtype(dtype).name}, "
                      f"B={B},T={T},D={D},labels={label_mode}): kernel={out} ref={ref}")

    if ok:
        print("KERNEL_OK")
</pallas_src>

<mosaic_0001>
module attributes {stable_mosaic.version = 11 : i64} {
  func.func @_regression_loss_kernel(%arg0: i32, %arg1: memref<16x32xf32, #tpu.memory_space<vmem>>, %arg2: memref<16x32xf32, #tpu.memory_space<vmem>>, %arg3: memref<16x1xf32, #tpu.memory_space<vmem>>, %arg4: memref<1x2xf32, #tpu.memory_space<smem>>) attributes {dimension_semantics = [#tpu.dimension_semantics<parallel>], iteration_bounds = array<i64: 1>, scalar_prefetch = 0 : i64, scratch_operands = 0 : i64, tpu.core_type = #tpu.core_type<tc>, window_params = [{transform_indices = @transform_0, window_bounds = array<i64: 16, 32>}, {transform_indices = @transform_1, window_bounds = array<i64: 16, 32>}, {transform_indices = @transform_2, window_bounds = array<i64: 16, 1>}, {transform_indices = @transform_3, window_bounds = array<i64: 1, 2>}]} {
    %c0 = arith.constant 0 : index
    %c0_0 = arith.constant 0 : index
    %0 = vector.load %arg1[%c0, %c0_0] : memref<16x32xf32, #tpu.memory_space<vmem>>, vector<16x32xf32>
    %c0_1 = arith.constant 0 : index
    %c0_2 = arith.constant 0 : index
    %1 = vector.load %arg2[%c0_1, %c0_2] : memref<16x32xf32, #tpu.memory_space<vmem>>, vector<16x32xf32>
    %2 = arith.subf %0, %1 : vector<16x32xf32>
    %3 = arith.mulf %2, %2 : vector<16x32xf32>
    %c0_3 = arith.constant 0 : index
    %c0_4 = arith.constant 0 : index
    %4 = vector.load %arg3[%c0_3, %c0_4] : memref<16x1xf32, #tpu.memory_space<vmem>>, vector<16x1xf32>
    %cst = arith.constant dense<0.000000e+00> : vector<16xf32>
    %5 = vector.multi_reduction <add>, %3, %cst [1] : vector<16x32xf32> to vector<16xf32>
    %6 = vector.shape_cast %5 : vector<16xf32> to vector<16x1xf32>
    %7 = arith.mulf %6, %4 : vector<16x1xf32>
    %8 = vector.shape_cast %7 : vector<16x1xf32> to vector<1x16x1xf32>
    %cst_5 = arith.constant dense<0.000000e+00> : vector<1xf32>
    %9 = vector.multi_reduction <add>, %8, %cst_5 [1, 2] : vector<1x16x1xf32> to vector<1xf32>
    %10 = vector.shape_cast %9 : vector<1xf32> to vector<1x1x1xf32>
    %11 = vector.extract %10[0, 0, 0] : f32 from vector<1x1x1xf32>
    %c0_6 = arith.constant 0 : index
    %c0_7 = arith.constant 0 : index
    %12 = memref.load %arg4[%c0_6, %c0_7] : memref<1x2xf32, #tpu.memory_space<smem>>
    memref.store %11, %arg4[%c0_6, %c0_7] : memref<1x2xf32, #tpu.memory_space<smem>>
    %13 = vector.shape_cast %4 : vector<16x1xf32> to vector<1x16x1xf32>
    %cst_8 = arith.constant dense<0.000000e+00> : vector<1xf32>
    %14 = vector.multi_reduction <add>, %13, %cst_8 [1, 2] : vector<1x16x1xf32> to vector<1xf32>
    %15 = vector.shape_cast %14 : vector<1xf32> to vector<1x1x1xf32>
    %16 = vector.extract %15[0, 0, 0] : f32 from vector<1x1x1xf32>
    %c0_9 = arith.constant 0 : index
    %c1 = arith.constant 1 : index
    %17 = memref.load %arg4[%c0_9, %c1] : memref<1x2xf32, #tpu.memory_space<smem>>
    memref.store %16, %arg4[%c0_9, %c1] : memref<1x2xf32, #tpu.memory_space<smem>>
    return
  }
  func.func @transform_0(%arg0: i32) -> (i32, i32) {
    %c0_i32 = arith.constant 0 : i32
    %c0_i32_0 = arith.constant 0 : i32
    return %arg0, %c0_i32 : i32, i32
  }
  func.func @transform_1(%arg0: i32) -> (i32, i32) {
    %c0_i32 = arith.constant 0 : i32
    %c0_i32_0 = arith.constant 0 : i32
    return %arg0, %c0_i32 : i32, i32
  }
  func.func @transform_2(%arg0: i32) -> (i32, i32) {
    %c0_i32 = arith.constant 0 : i32
    %c0_i32_0 = arith.constant 0 : i32
    return %arg0, %c0_i32 : i32, i32
  }
  func.func @transform_3(%arg0: i32) -> (i32, i32) {
    %c0_i32 = arith.constant 0 : i32
    %c0_i32_0 = arith.constant 0 : i32
    return %arg0, %c0_i32 : i32, i32
  }
}

</mosaic_0001>

<llo_original>
// kernel: tpu_custom_call.1
$region0: #{tpu_custom_call.1}
  #allocation0 [shape = 'u32[]', space=smem, size = 0x4, offset = 0x4, fixed_abs, tag = 'smem constant byte address 0x4 - core index']
  #allocation1 [shape = 'u32[144,128]{1,0:T(1,128)}', space=vmem, size = 0x12000, scoped, tag = 'internal scratch']
  %s0 = inlined_call_operand.vmem [shape: f32[16,32], index: 0, kind: input, shape index: {}]
  %s1 = inlined_call_operand.hbm [shape: f32[16,32], index: 1, kind: input, shape index: {}]
  %s2 = inlined_call_operand.vmem [shape: f32[16,1], index: 2, kind: input, shape index: {}]
  %s3 = inlined_call_operand.hbm [shape: f32[1,2], index: 3, kind: output, shape index: {}]
  %s4 = sld [smem:[#allocation0]]
  $region26: #{tpu_custom_call.1} parent=0
    _
  %s6 = ssub.s32 1, %s4
  %s7 = scalar_select 0, %s6, %s4
  $region1: #{tpu_custom_call.1} parent=0
    #allocation2 [shape = 'u8[8192]{0}', space=vmem, size = 0x2000, scoped, tag = 'input window, operand 1, single buffered']
    #allocation3 [shape = 's32[1]{0}', space=sflag, size = 0x4, scoped, tag = 'scoped memory for tpu_custom_call.1']
    #allocation4 [shape = 's32[1]{0}', space=sflag, size = 0x4, scoped, tag = 'scoped memory for tpu_custom_call.1']
    #allocation5 [shape = 'u8[512]{0}', space=smem, size = 0x200, scoped, tag = 'output window, operand 0, single buffered']
    %8 = vsyncpa [#allocation3], 0
    %9 = vsyncpa [#allocation4], 0
    // Predicated region
    $region2: #{tpu_custom_call.1} parent=1 // pred_check
      _
    $region3: #{tpu_custom_call.1} parent=1 // pred_check_branch
      %11 = sbr.rel (0) target = $region5
    $region4: #{tpu_custom_call.1} parent=1 // pred_region
      _
    $region5: #{tpu_custom_call.1} parent=1 // pred_fallthru
      _
    // Predicated region
    $region6: #{tpu_custom_call.1} parent=1 // pred_check
      _
    $region7: #{tpu_custom_call.1} parent=1 // pred_check_branch
      %13 = sbr.rel (0) target = $region9
    $region8: #{tpu_custom_call.1} parent=1 // pred_region
      %s15 = ssub.s32 256, 256
      %16 = vsyncadd [#allocation3], %s15
      %s17 = sshll.u32 [#allocation2], 4
      %s18 = int_to_ptr.vmem [resolvable:$true] %s17
      %23 = dma.hbm_to_vmem [thread:$0]  %s1, 256, %s18, [#allocation3], 128, 128, 8
    $region9: #{tpu_custom_call.1} parent=1 // pred_fallthru
      _
    // Predicated region
    $region10: #{tpu_custom_call.1} parent=1 // pred_check
      _
    $region11: #{tpu_custom_call.1} parent=1 // pred_check_branch
      %25 = sbr.rel (0) target = $region13
    $region12: #{tpu_custom_call.1} parent=1 // pred_region
      _
    $region13: #{tpu_custom_call.1} parent=1 // pred_fallthru
      _
    // Predicated region
    $region14: #{tpu_custom_call.1} parent=1 // pred_check
      _
    $region15: #{tpu_custom_call.1} parent=1 // pred_check_branch
      %27 = sbr.rel (0) target = $region17
    $region16: #{tpu_custom_call.1} parent=1 // pred_region
      %28 = dma.done [#allocation3], 256
    $region17: #{tpu_custom_call.1} parent=1 // pred_fallthru
      _
    %v29 = vld [vmem:[%s0] sm:$0xff]
    %v30 = vld [vmem:[%s0 + $0x8] sm:$0xff]
    %v31 = vld [vmem:[#allocation2] sm:$0xff]
    %v32 = vld [vmem:[#allocation2 + $0x8] sm:$0xff]
    %v33 = vsub.f32 %v29, %v31
    %v34 = vsub.f32 %v30, %v32
    %v35 = vmul.f32 %v33, %v33
    %v36 = vmul.f32 %v34, %v34
    %v37 = vld [vmem:[%s2] sm:$0xff]
    %v38 = vld [vmem:[%s2 + $0x8] sm:$0xff]
    %vm39 = vcmask 261120
    %v40 = vsel %vm39, %v35, 0.0
    %41 = vadd.xlane.f32.xlu0 %v40
    %v42 = vpop.xlane.xlu0 %41
    %v43 = vsel %vm39, %v36, 0.0
    %44 = vadd.xlane.f32.xlu0 %v43
    %v45 = vpop.xlane.xlu0 %44
    %v46 = vmul.f32 %v42, %v37
    %v47 = vmul.f32 %v45, %v38
    %vm48 = vcmask 7168
    %v49 = vsel %vm48, %v46, 0.0
    %v50 = vsel %vm48, %v47, 0.0
    %v51 = vadd.f32 %v49, %v50
    %52 = vadd.xlane.f32.xlu0 %v51
    %v53 = vpop.xlane.xlu0 %52
    %v54 = vrot.slane %v53, 4
    %v55 = vadd.f32 %v53, %v54
    %v56 = vrot.slane %v55, 2
    %v57 = vadd.f32 %v55, %v56
    %v58 = vrot.slane %v57, 1
    %v59 = vadd.f32 %v57, %v58
    %s60 = vtos %v59
    %s61 = scalar_lea.smem [#allocation5], 0
    %62 = sst [smem:[%s61]] %s60
    %v63 = vsel %vm48, %v37, 0.0
    %v64 = vsel %vm48, %v38, 0.0
    %v65 = vadd.f32 %v63, %v64
    %66 = vadd.xlane.f32.xlu0 %v65
    %v67 = vpop.xlane.xlu0 %66
    %v68 = vrot.slane %v67, 4
    %v69 = vadd.f32 %v67, %v68
    %v70 = vrot.slane %v69, 2
    %v71 = vadd.f32 %v69, %v70
    %v72 = vrot.slane %v71, 1
    %v73 = vadd.f32 %v71, %v72
    %s74 = vtos %v73
    %s75 = scalar_lea.smem [#allocation5], 1
    %76 = sst [smem:[%s75]] %s74
    // Predicated region
    $region18: #{tpu_custom_call.1} parent=1 // pred_check
      _
    $region19: #{tpu_custom_call.1} parent=1 // pred_check_branch
      %78 = sbr.rel (0) target = $region21
    $region20: #{tpu_custom_call.1} parent=1 // pred_region
      %s80 = ssub.s32 16, 16
      %81 = vsyncadd [#allocation4], %s80
      %84 = dma.smem_to_hbm [#allocation5], 16, %s3, [#allocation4]
    $region21: #{tpu_custom_call.1} parent=1 // pred_fallthru
      _
    // Predicated region
    $region22: #{tpu_custom_call.1} parent=1 // pred_check
      _
    $region23: #{tpu_custom_call.1} parent=1 // pred_check_branch
      %86 = sbr.rel (0) target = $region25
    $region24: #{tpu_custom_call.1} parent=1 // pred_region
      %87 = dma.done [#allocation4], 16
    $region25: #{tpu_custom_call.1} parent=1 // pred_fallthru
      _
    %88 = sfence
    %89 = vsyncpa [#allocation3], 1
    %90 = vsyncpa [#allocation4], 1

</llo_original>
